<compile_context>
chip_gen: v7x
topology: tpu7x:2x2x1
jax: 0.10.0
libtpu: 0.0.40
codegen_flags: <defaults>
</compile_context>

<pallas_src>
import math

import jax
import jax.numpy as jnp
from jax.experimental import pallas as pl
from jax.experimental.pallas import tpu as pltpu


def _sigmoid_kernel(x_ref, o_ref):
    x = x_ref[...]
    # Keep bf16/f32 math native (bf16 VPU/EUP on v6e/v7x; Mosaic legalizes on v5e);
    # anything else computes in f32.
    if x.dtype in (jnp.dtype(jnp.float32), jnp.dtype(jnp.bfloat16)):
        cdt = x.dtype
    else:
        cdt = jnp.dtype(jnp.float32)
    xc = x.astype(cdt)
    half = jnp.asarray(0.5, cdt)
    # sigmoid(x) == 0.5 * tanh(0.5 * x) + 0.5  (single transcendental, no divide)
    y = half * jnp.tanh(half * xc) + half
    o_ref[...] = y.astype(o_ref.dtype)


def _round_up(a, b):
    return -(-a // b) * b


def sigmoid_feature_map(x, *, max_lanes=1024):
    """Elementwise sigmoid(x) for any shape, same dtype as x."""
    orig_shape = x.shape
    n = math.prod(orig_shape) if orig_shape else 1
    if n == 0:
        return x  # nothing to do for empty tensors

    itemsize = jnp.dtype(x.dtype).itemsize
    pack = max(1, 4 // itemsize)          # elements per 32-bit sublane slot
    sub_mult = 8 * pack                   # sublane multiple: 8 f32 / 16 bf16 / 32 int8

    # Generation-aware VMEM budget (v7x has 64 MiB physical, v5e/v6e 128 MiB).
    try:
        vmem_cap = int(pltpu.get_tpu_info().vmem_capacity_bytes)
    except Exception:  # non-TPU / interpret fallback: assume the smallest (v7x)
        vmem_cap = 64 * 1024 * 1024
    vmem_budget = min(64 * 1024 * 1024,
                      max(16 * 1024 * 1024, vmem_cap - 16 * 1024 * 1024))
    # Double-buffered input + output = 4x tile bytes must fit the budget.
    max_tile_bytes = min(12 * 1024 * 1024, vmem_budget // 4)

    # Only split a single-block tensor across 2 blocks (v7x megacore) if it is
    # large enough that the extra grid step is negligible.
    split_threshold_bytes = 2 * 1024 * 1024

    # Prefer a lane-dense 2-D view: columns a multiple of 128 dividing n.
    c = None
    cand = max_lanes
    while cand >= 128:
        if n % cand == 0:
            c = cand
            break
        cand //= 2

    if c is not None:
        rows = n // c
        x_view = x.reshape(rows, c)
        tm_budget = max(sub_mult, max_tile_bytes // (c * itemsize))
        if tm_budget >= rows:
            if rows >= 2 * sub_mult and n * itemsize > split_threshold_bytes:
                tm = _round_up((rows + 1) // 2, sub_mult)   # >= 2 blocks for v7x
            else:
                tm = rows                                   # full extent (legal)
        else:
            tm = (tm_budget // sub_mult) * sub_mult
        grid = (pl.cdiv(rows, tm),)
        block = (tm, c)
        view_shape = (rows, c)
        index_map = lambda i: (i, 0)
    else:
        # Flat 1-D lane-dense fallback: any n, blocks are multiples of 8x128
        # (x packing), only the ragged last block pays masked stores.
        x_view = x.reshape(n)
        unit = sub_mult * 128
        blk_budget = max(unit, max_tile_bytes // itemsize)
        if blk_budget >= n:
            if n >= 2 * unit and n * itemsize > split_threshold_bytes:
                blk = _round_up((n + 1) // 2, unit)
            else:
                blk = n                                     # full extent (legal)
        else:
            blk = (blk_budget // unit) * unit
        grid = (pl.cdiv(n, blk),)
        block = (blk,)
        view_shape = (n,)
        index_map = lambda i: (i,)

    cost = pl.CostEstimate(
        flops=3 * n,                       # two muls + add around the tanh
        transcendentals=n,                 # one tanh per element
        bytes_accessed=2 * n * itemsize,   # read x + write y
    )

    out = pl.pallas_call(
        _sigmoid_kernel,
        out_shape=jax.ShapeDtypeStruct(view_shape, x.dtype),
        grid_spec=pltpu.PrefetchScalarGridSpec(
            num_scalar_prefetch=0,
            grid=grid,
            in_specs=[pl.BlockSpec(block, index_map)],
            out_specs=pl.BlockSpec(block, index_map),
        ),
        compiler_params=pltpu.CompilerParams(
            dimension_semantics=("parallel",),
            vmem_limit_bytes=vmem_budget,
        ),
        cost_estimate=cost,
    )(x_view)

    return out.reshape(orig_shape)


if __name__ == "__main__":
    key = jax.random.PRNGKey(0)

    # Main test: feature-map style input x[B, H, T, head_dim], f32.
    B, H, T, head_dim = 2, 4, 16, 32
    k0, k1, k2 = jax.random.split(key, 3)
    x = jax.random.normal(k0, (B, H, T, head_dim), dtype=jnp.float32)
    y = sigmoid_feature_map(x)
    jax.block_until_ready(y)
    ref = jax.nn.sigmoid(x)
    assert y.shape == x.shape and y.dtype == x.dtype
    assert jnp.allclose(y, ref, atol=1e-5, rtol=1e-5)

    # bf16 path (native bf16 math in-kernel).
    xb = jax.random.normal(k1, (B, H, T, head_dim), dtype=jnp.bfloat16)
    yb = sigmoid_feature_map(xb)
    jax.block_until_ready(yb)
    refb = jax.nn.sigmoid(xb.astype(jnp.float32)).astype(jnp.bfloat16)
    assert yb.dtype == xb.dtype
    assert jnp.allclose(yb.astype(jnp.float32), refb.astype(jnp.float32), atol=2e-2)

    # Non-128-divisible flat size -> 1-D lane-dense fallback path.
    xo = jax.random.normal(k2, (2, 3, 5, 7), dtype=jnp.float32)
    yo = sigmoid_feature_map(xo)
    jax.block_until_ready(yo)
    assert yo.shape == xo.shape and yo.dtype == xo.dtype
    assert jnp.allclose(yo, jax.nn.sigmoid(xo), atol=1e-5, rtol=1e-5)

    print("KERNEL_OK")
</pallas_src>

<mosaic_0001>
module attributes {stable_mosaic.version = 11 : i64} {
  func.func @_sigmoid_kernel(%arg0: i32, %arg1: memref<4x1024xf32, #tpu.memory_space<vmem>>, %arg2: memref<4x1024xf32, #tpu.memory_space<vmem>>) attributes {dimension_semantics = [#tpu.dimension_semantics<parallel>], iteration_bounds = array<i64: 1>, scalar_prefetch = 0 : i64, scratch_operands = 0 : i64, tpu.core_type = #tpu.core_type<tc>, window_params = [{transform_indices = @transform_0, window_bounds = array<i64: 4, 1024>}, {transform_indices = @transform_1, window_bounds = array<i64: 4, 1024>}]} {
    %c0 = arith.constant 0 : index
    %c0_0 = arith.constant 0 : index
    %0 = vector.load %arg1[%c0, %c0_0] : memref<4x1024xf32, #tpu.memory_space<vmem>>, vector<4x1024xf32>
    %cst = arith.constant 5.000000e-01 : f32
    %1 = vector.broadcast %cst : f32 to vector<4x1024xf32>
    %2 = arith.mulf %1, %0 : vector<4x1024xf32>
    %3 = math.tanh %2 : vector<4x1024xf32>
    %cst_1 = arith.constant 5.000000e-01 : f32
    %4 = vector.broadcast %cst_1 : f32 to vector<4x1024xf32>
    %5 = arith.mulf %4, %3 : vector<4x1024xf32>
    %cst_2 = arith.constant 5.000000e-01 : f32
    %6 = vector.broadcast %cst_2 : f32 to vector<4x1024xf32>
    %7 = arith.addf %5, %6 : vector<4x1024xf32>
    %c0_3 = arith.constant 0 : index
    %c0_4 = arith.constant 0 : index
    %8 = vector.load %arg2[%c0_3, %c0_4] : memref<4x1024xf32, #tpu.memory_space<vmem>>, vector<4x1024xf32>
    tpu.vector_store %arg2[%c0_3, %c0_4], %7 {strides = array<i32>} : memref<4x1024xf32, #tpu.memory_space<vmem>>, vector<4x1024xf32>,
    return
  }
  func.func @transform_0(%arg0: i32) -> (i32, i32) {
    %c0_i32 = arith.constant 0 : i32
    %c0_i32_0 = arith.constant 0 : i32
    return %arg0, %c0_i32 : i32, i32
  }
  func.func @transform_1(%arg0: i32) -> (i32, i32) {
    %c0_i32 = arith.constant 0 : i32
    %c0_i32_0 = arith.constant 0 : i32
    return %arg0, %c0_i32 : i32, i32
  }
}

</mosaic_0001>

<llo_original>
// kernel: tpu_custom_call.1
$region0: #{tpu_custom_call.1}
  #allocation0 [shape = 'u32[]', space=smem, size = 0x4, offset = 0x4, fixed_abs, tag = 'smem constant byte address 0x4 - core index']
  #allocation1 [shape = 'u32[144,128]{1,0:T(1,128)}', space=vmem, size = 0x12000, scoped, tag = 'internal scratch']
  %s0 = inlined_call_operand.hbm [shape: f32[4,1024], index: 0, kind: input, shape index: {}]
  %s1 = inlined_call_operand.hbm [shape: f32[4,1024], index: 1, kind: output, shape index: {}]
  %s2 = sld [smem:[#allocation0]]
  $region18: #{tpu_custom_call.1} parent=0
    _
  %s4 = ssub.s32 1, %s2
  %s5 = scalar_select 0, %s4, %s2
  $region1: #{tpu_custom_call.1} parent=0
    #allocation2 [shape = 'u8[16384]{0}', space=vmem, size = 0x4000, scoped, tag = 'input window, operand 0, single buffered']
    #allocation3 [shape = 's32[1]{0}', space=sflag, size = 0x4, scoped, tag = 'scoped memory for tpu_custom_call.1']
    #allocation4 [shape = 's32[1]{0}', space=sflag, size = 0x4, scoped, tag = 'scoped memory for tpu_custom_call.1']
    #allocation5 [shape = 'u8[16384]{0}', space=vmem, size = 0x4000, scoped, tag = 'output window, operand 0, single buffered']
    %6 = vsyncpa [#allocation3], 0
    %7 = vsyncpa [#allocation4], 0
    // Predicated region
    $region2: #{tpu_custom_call.1} parent=1 // pred_check
      _
    $region3: #{tpu_custom_call.1} parent=1 // pred_check_branch
      %9 = sbr.rel (0) target = $region5
    $region4: #{tpu_custom_call.1} parent=1 // pred_region
      %s11 = ssub.s32 512, 512
      %12 = vsyncadd [#allocation3], %s11
      %s14 = sshll.u32 [#allocation2], 4
      %s15 = int_to_ptr.vmem [resolvable:$true] %s14
      %17 = dma.hbm_to_vmem [thread:$0]  %s0, 512, %s15, [#allocation3]
    $region5: #{tpu_custom_call.1} parent=1 // pred_fallthru
      _
    // Predicated region
    $region6: #{tpu_custom_call.1} parent=1 // pred_check
      _
    $region7: #{tpu_custom_call.1} parent=1 // pred_check_branch
      %19 = sbr.rel (0) target = $region9
    $region8: #{tpu_custom_call.1} parent=1 // pred_region
      %20 = dma.done [#allocation3], 512
    $region9: #{tpu_custom_call.1} parent=1 // pred_fallthru
      _
    %v21 = vld [vmem:[#allocation2] sm:$0xff]
    %v22 = vld [vmem:[#allocation2 + $0x8] sm:$0xff]
    %v23 = vld [vmem:[#allocation2 + $0x10] sm:$0xff]
    %v24 = vld [vmem:[#allocation2 + $0x18] sm:$0xff]
    %v25 = vmul.f32 %v21, 0.5
    %v26 = vmul.f32 %v22, 0.5
    %v27 = vmul.f32 %v23, 0.5
    %v28 = vmul.f32 %v24, 0.5
    %v29 = vtanh.pop %v25
    %v30 = vtanh.pop %v26
    %v31 = vtanh.pop %v27
    %v32 = vtanh.pop %v28
    %v33 = vmul.f32 %v29, 0.5
    %v34 = vmul.f32 %v30, 0.5
    %v35 = vmul.f32 %v31, 0.5
    %v36 = vmul.f32 %v32, 0.5
    %v37 = vadd.f32 %v33, 0.5
    %v38 = vadd.f32 %v34, 0.5
    %v39 = vadd.f32 %v35, 0.5
    %v40 = vadd.f32 %v36, 0.5
    %41 = vst [vmem:[#allocation5] sm:$0xff] %v37
    %42 = vst [vmem:[#allocation5 + $0x8] sm:$0xff] %v38
    %43 = vst [vmem:[#allocation5 + $0x10] sm:$0xff] %v39
    %44 = vst [vmem:[#allocation5 + $0x18] sm:$0xff] %v40
    // Predicated region
    $region10: #{tpu_custom_call.1} parent=1 // pred_check
      _
    $region11: #{tpu_custom_call.1} parent=1 // pred_check_branch
      %46 = sbr.rel (0) target = $region13
    $region12: #{tpu_custom_call.1} parent=1 // pred_region
      %s48 = ssub.s32 512, 512
      %49 = vsyncadd [#allocation4], %s48
      %s51 = sshll.u32 [#allocation5], 4
      %s52 = int_to_ptr.vmem [resolvable:$true] %s51
      %54 = dma.vmem_to_hbm [thread:$0]  %s52, 512, %s1, [#allocation4]
    $region13: #{tpu_custom_call.1} parent=1 // pred_fallthru
      _
    // Predicated region
    $region14: #{tpu_custom_call.1} parent=1 // pred_check
      _
    $region15: #{tpu_custom_call.1} parent=1 // pred_check_branch
      %56 = sbr.rel (0) target = $region17
    $region16: #{tpu_custom_call.1} parent=1 // pred_region
      %57 = dma.done [#allocation4], 512
    $region17: #{tpu_custom_call.1} parent=1 // pred_fallthru
      _
    %58 = vsyncpa [#allocation3], 1
    %59 = vsyncpa [#allocation4], 1

</llo_original>
